<compile_context>
chip_gen: v5e
topology: v5e:2x2
jax: 0.10.0
libtpu: 0.0.40
codegen_flags: <defaults>
</compile_context>

<pallas_src>
import jax
import jax.numpy as jnp
from jax.experimental import pallas as pl
from jax.experimental.pallas import tpu as pltpu


def _round_up(x, m):
    return (x + m - 1) // m * m


def _pick_tile(padded, target, base):
    """Largest multiple of `base` that divides `padded` and is <= target."""
    t = min(target, padded)
    t = max((t // base) * base, base)
    while padded % t != 0:
        t -= base
    return max(t, base)


_VMEM_LIMIT = None


def _vmem_limit_bytes():
    """Generation-aware scoped-VMEM ceiling (≈3/4 of physical, capped)."""
    global _VMEM_LIMIT
    if _VMEM_LIMIT is None:
        try:
            cap = pltpu.get_tpu_info().vmem_capacity_bytes
        except Exception:
            cap = 64 << 20          # conservative fallback (v7x-sized)
        _VMEM_LIMIT = int(min(cap * 3 // 4, 100 << 20))
    return _VMEM_LIMIT


# ----------------------------------------------------------------------------
# Tiled linear projection kernel:  o = x @ w + b
# ----------------------------------------------------------------------------
def _linear_kernel(x_ref, w_ref, b_ref, o_ref, acc_ref):
    # Zero the resident accumulator at the start of the K loop.
    @pl.when(pl.program_id(2) == 0)
    def _init():
        acc_ref[...] = jnp.zeros_like(acc_ref)

    # f32 activation tile cast to bf16 in-kernel (VPU has slack under the MXU
    # loop); bf16 x bf16 -> f32 accumulate on the MXU.
    acc_ref[...] += jnp.dot(x_ref[...].astype(w_ref.dtype), w_ref[...],
                            preferred_element_type=jnp.float32)

    # Bias is added exactly once, on the f32 accumulator, at the last K step.
    @pl.when(pl.program_id(2) == pl.num_programs(2) - 1)
    def _finalize():
        o_ref[...] = (acc_ref[...] + b_ref[...]).astype(o_ref.dtype)


def _pallas_linear_packed(x, wp, bp, n_out, *, tm=512, tn=256, tk=512):
    """x: (M, K) f32, wp: (Kp, Np) bf16 (pre-padded), bp: (1, Np) f32.

    Returns (M, n_out) f32.  M is padded to a multiple of 8, K to match Kp;
    the activation cast f32->bf16 happens inside the kernel.  Tiles are chosen
    as divisors of the padded dims so no extra zero padding is introduced.
    """
    M, K = x.shape
    Kp, Np = wp.shape
    assert Kp >= K and Kp % 128 == 0 and Np % 128 == 0

    Mp = _round_up(M, 8)
    if Mp != M or Kp != K:
        x = jnp.pad(x, ((0, Mp - M), (0, Kp - K)))

    tm = _pick_tile(Mp, tm, 8)
    tn = _pick_tile(Np, tn, 128)
    tk = _pick_tile(Kp, tk, 128)

    # If both parallel axes collapse to a single block, split M so a second
    # TensorCore (v7x megacore) has work.  Harmless on v5e/v6e.
    if (Mp // tm) * (Np // tn) < 2 and Mp >= 16:
        tm = _pick_tile(Mp, Mp // 2, 8)

    grid = (Mp // tm, Np // tn, Kp // tk)
    gm, gn, gk = grid
    cost = pl.CostEstimate(
        flops=2 * Mp * Np * Kp,
        transcendentals=0,
        # x re-streamed per N tile, w re-streamed per M tile, out written once.
        bytes_accessed=(Mp * Kp * 4) * gn + (Kp * Np * 2) * gm + Mp * Np * 4,
    )

    out = pl.pallas_call(
        _linear_kernel,
        out_shape=jax.ShapeDtypeStruct((Mp, Np), jnp.float32),
        grid_spec=pltpu.PrefetchScalarGridSpec(
            num_scalar_prefetch=0,
            grid=grid,
            in_specs=[
                pl.BlockSpec((tm, tk), lambda i, j, k: (i, k)),
                pl.BlockSpec((tk, tn), lambda i, j, k: (k, j)),
                pl.BlockSpec((1, tn), lambda i, j, k: (0, j)),
            ],
            out_specs=pl.BlockSpec((tm, tn), lambda i, j, k: (i, j)),
            scratch_shapes=[pltpu.VMEM((tm, tn), jnp.float32)],
        ),
        compiler_params=pltpu.CompilerParams(
            dimension_semantics=("parallel", "parallel", "arbitrary"),
            vmem_limit_bytes=_vmem_limit_bytes(),
        ),
        cost_estimate=cost,
    )(x, wp, bp)
    return out[:M, :n_out]


class PackedLinear:
    """Holds weights pre-padded to 128-multiples and pre-cast to bf16."""

    def __init__(self, w, b, compute_dtype=jnp.bfloat16):
        K, N = w.shape
        self.K, self.N = K, N
        Kp = _round_up(K, 128)
        Np = _round_up(N, 128)
        self.wp = jnp.pad(w, ((0, Kp - K), (0, Np - N))).astype(compute_dtype)
        self.bp = jnp.pad(b.astype(jnp.float32), (0, Np - N)).reshape(1, Np)

    def __call__(self, x_2d):
        return _pallas_linear_packed(x_2d, self.wp, self.bp, self.N)


# ----------------------------------------------------------------------------
# Token-embedding lookup as a DMA gather (no one-hot, no O(M*V) work)
# ----------------------------------------------------------------------------
def _gather_kernel(tok_ref, table_ref, o_ref, sem):
    # tok_ref: (Mp,) int32 in SMEM (scalar prefetch)
    # table_ref: (V, Dp) in HBM (pl.ANY) -> per-row async copies into o_ref
    i = pl.program_id(0)
    nrows = o_ref.shape[0]
    copies = []
    for r in range(nrows):                     # static unroll: R in-flight DMAs
        tok = tok_ref[i * nrows + r]
        cp = pltpu.make_async_copy(table_ref.at[pl.ds(tok, 1)],
                                   o_ref.at[pl.ds(r, 1)],
                                   sem.at[r])
        cp.start()
        copies.append(cp)
    for cp in copies:
        cp.wait()


def pallas_embedding_lookup(tokens_flat, table_padded, d_out, *,
                            rows_per_block=32):
    """tokens_flat: (M,) int, table_padded: (V, Dp) f32 (Dp % 128 == 0)
    -> (M, d_out) f32."""
    M = tokens_flat.shape[0]
    V, Dp = table_padded.shape
    assert Dp % 128 == 0
    R = rows_per_block
    Mp = _round_up(M, R)
    # Padded tokens gather row 0 into rows that are sliced off below.
    toks = jnp.pad(tokens_flat.astype(jnp.int32), (0, Mp - M))

    out = pl.pallas_call(
        _gather_kernel,
        out_shape=jax.ShapeDtypeStruct((Mp, Dp), table_padded.dtype),
        grid_spec=pltpu.PrefetchScalarGridSpec(
            num_scalar_prefetch=1,
            grid=(Mp // R,),
            in_specs=[pl.BlockSpec(memory_space=pl.ANY)],   # table stays in HBM
            out_specs=pl.BlockSpec((R, Dp), lambda i, tok: (i, 0)),
            scratch_shapes=[pltpu.SemaphoreType.DMA((R,))],
        ),
        compiler_params=pltpu.CompilerParams(
            # Disjoint output rows per step -> shardable across v7x's 2 TCs.
            dimension_semantics=("parallel",)),
    )(toks, table_padded)
    return out[:M, :d_out]


# ----------------------------------------------------------------------------
# Embedding classes (weights initialized deterministically in-script)
# ----------------------------------------------------------------------------
class VisionPatchEmbedding:
    """NCHW image -> (B, num_patches, dim) via patchify + tiled Pallas matmul."""

    def __init__(self, in_channels, patch_size, dim, seed=1):
        self.p = patch_size
        self.dim = dim
        k = in_channels * patch_size * patch_size
        kw, kb = jax.random.split(jax.random.PRNGKey(seed))
        self.w = jax.random.normal(kw, (k, dim), jnp.float32) * 0.02
        self.b = jax.random.normal(kb, (dim,), jnp.float32) * 0.02
        self._proj = PackedLinear(self.w, self.b)

    def __call__(self, x):
        B, C, H, W = x.shape
        p = self.p
        x = x.reshape(B, C, H // p, p, W // p, p)
        x = jnp.transpose(x, (0, 2, 4, 1, 3, 5))          # (B, Hp, Wp, C, p, p)
        nP = (H // p) * (W // p)
        patches = x.reshape(B * nP, C * p * p)
        out = self._proj(patches)
        return out.reshape(B, nP, self.dim)


class AudioFrameEmbedding:
    """(B, T, F) -> (B, T, dim) via per-frame tiled Pallas linear projection."""

    def __init__(self, in_features, dim, seed=2):
        kw, kb = jax.random.split(jax.random.PRNGKey(seed))
        self.dim = dim
        self.w = jax.random.normal(kw, (in_features, dim), jnp.float32) * 0.02
        self.b = jax.random.normal(kb, (dim,), jnp.float32) * 0.02
        self._proj = PackedLinear(self.w, self.b)

    def __call__(self, x):
        B, T, F = x.shape
        out = self._proj(x.reshape(B * T, F))
        return out.reshape(B, T, self.dim)


class TextTokenEmbedding:
    """(B, S) int tokens -> (B, S, dim) via Pallas DMA-gather lookup."""

    def __init__(self, vocab_size, dim, seed=3):
        self.dim = dim
        self.table = jax.random.normal(
            jax.random.PRNGKey(seed), (vocab_size, dim), jnp.float32) * 0.02
        # Pad the embedding dim to a lane multiple once at init so each
        # gathered row / output store is lane-dense (no vst.msk partials).
        Dp = _round_up(dim, 128)
        self._table_padded = jnp.pad(self.table, ((0, 0), (0, Dp - dim)))

    def __call__(self, tokens):
        B, S = tokens.shape
        out = pallas_embedding_lookup(tokens.reshape(B * S),
                                      self._table_padded, self.dim)
        return out.reshape(B, S, self.dim)


class VideoFrameEmbedding:
    """(B, C, T, H, W) -> (B, T, dim); K = C*H*W is streamed via K-tiling."""

    def __init__(self, in_channels, height, width, dim, seed=4):
        k = in_channels * height * width
        kw, kb = jax.random.split(jax.random.PRNGKey(seed))
        self.dim = dim
        self.w = jax.random.normal(kw, (k, dim), jnp.float32) * 0.02
        self.b = jax.random.normal(kb, (dim,), jnp.float32) * 0.02
        self._proj = PackedLinear(self.w, self.b)

    def __call__(self, x):
        B, C, T, H, W = x.shape
        x = jnp.transpose(x, (0, 2, 1, 3, 4)).reshape(B * T, C * H * W)
        out = self._proj(x)
        return out.reshape(B, T, self.dim)


# ----------------------------------------------------------------------------
# OmniMorph: registry + modality detection + dispatch (matches PyTorch module)
# ----------------------------------------------------------------------------
class OmniMorph:
    def __init__(self):
        self._embedding_registry = {}
        self._embedding_instances = {}

    def register_embedding(self, modality_type, embedding_class):
        self._embedding_registry[modality_type] = embedding_class

    def instantiate_embedding(self, modality_type, embedding_class=None,
                              *args, **kwargs):
        if embedding_class is None:
            embedding_class = self._embedding_registry.get(modality_type)
        if embedding_class is not None:
            self._embedding_instances[modality_type] = embedding_class(
                *args, **kwargs)
        else:
            raise ValueError(f"Unsupported modality type: {modality_type}")

    def __call__(self, input_data, modality_type=None, **kwargs):
        if modality_type is None:
            modality_type = self.detect_modality(input_data)
        embedding_instance = self._embedding_instances.get(modality_type)
        if embedding_instance is not None:
            return embedding_instance(input_data, **kwargs)
        raise ValueError(
            f"Embedding for modality type {modality_type} not instantiated")

    def detect_modality(self, input_data):
        # Shape/dtype detection is a static, trace-time branch in JAX.
        # NOTE: any 2-D integer array is treated as text (parity with the
        # PyTorch int64 check; JAX default-disables x64).
        if (len(input_data.shape) == 2
                and jnp.issubdtype(input_data.dtype, jnp.integer)):
            return "text"
        elif len(input_data.shape) == 4:
            return "vision"
        elif len(input_data.shape) == 3:
            return "audio"
        elif len(input_data.shape) == 5:
            return "video"
        else:
            raise ValueError("Unable to detect input data modality")


# ----------------------------------------------------------------------------
# Demo / correctness check
# ----------------------------------------------------------------------------
def _bf16_round(x):
    return x.astype(jnp.bfloat16).astype(jnp.float32)


def _ref_linear(x, w, b):
    # Reference matches the kernel's bf16-operand / f32-accumulate contract.
    return jnp.dot(_bf16_round(x), _bf16_round(w),
                   precision=jax.lax.Precision.HIGHEST) + b


if __name__ == "__main__":
    key = jax.random.PRNGKey(0)
    k_v, k_t, k_a, k_vid = jax.random.split(key, 4)

    B, C, H, W = 2, 4, 16, 16
    S, F, D, VOCAB = 8, 32, 32, 64
    VT, VH, VW = 2, 16, 16          # video: K = C*VH*VW = 1024 -> 2 K-tiles

    x_vision = jax.random.normal(k_v, (B, C, H, W), jnp.float32)
    x_text = jax.random.randint(k_t, (B, S), 0, VOCAB, jnp.int32)
    x_audio = jax.random.normal(k_a, (B, S, F), jnp.float32)
    x_video = jax.random.normal(k_vid, (B, C, VT, VH, VW), jnp.float32)

    model = OmniMorph()
    model.register_embedding("vision", VisionPatchEmbedding)
    model.register_embedding("text", TextTokenEmbedding)
    model.register_embedding("audio", AudioFrameEmbedding)
    model.register_embedding("video", VideoFrameEmbedding)

    model.instantiate_embedding("vision", in_channels=C, patch_size=4, dim=D)
    model.instantiate_embedding("text", vocab_size=VOCAB, dim=D)
    model.instantiate_embedding("audio", in_features=F, dim=D)
    model.instantiate_embedding("video", in_channels=C, height=VH, width=VW, dim=D)

    # --- vision path (auto-detected from 4D shape) ---
    out_v = jax.block_until_ready(model(x_vision))
    ve = model._embedding_instances["vision"]
    p = ve.p
    nP = (H // p) * (W // p)
    patches = jnp.transpose(
        x_vision.reshape(B, C, H // p, p, W // p, p),
        (0, 2, 4, 1, 3, 5)).reshape(B * nP, C * p * p)
    ref_v = _ref_linear(patches, ve.w, ve.b).reshape(B, nP, D)
    assert out_v.shape == (B, nP, D)
    assert jnp.allclose(out_v, ref_v, atol=1e-3)

    # --- text path (auto-detected from 2D integer input) ---
    out_t = jax.block_until_ready(model(x_text))
    te = model._embedding_instances["text"]
    ref_t = te.table[x_text]
    assert out_t.shape == (B, S, D)
    assert jnp.allclose(out_t, ref_t, atol=1e-5)

    # --- audio path (auto-detected from 3D shape) ---
    out_a = jax.block_until_ready(model(x_audio))
    ae = model._embedding_instances["audio"]
    ref_a = _ref_linear(x_audio.reshape(B * S, F), ae.w, ae.b).reshape(B, S, D)
    assert out_a.shape == (B, S, D)
    assert jnp.allclose(out_a, ref_a, atol=1e-3)

    # --- video path (auto-detected from 5D shape; exercises K accumulation) ---
    out_vid = jax.block_until_ready(model(x_video))
    vide = model._embedding_instances["video"]
    frames = jnp.transpose(x_video, (0, 2, 1, 3, 4)).reshape(B * VT, C * VH * VW)
    ref_vid = _ref_linear(frames, vide.w, vide.b).reshape(B, VT, D)
    assert out_vid.shape == (B, VT, D)
    assert jnp.allclose(out_vid, ref_vid, atol=1e-3)

    print("KERNEL_OK")
</pallas_src>

<mosaic_0001>
module attributes {stable_mosaic.version = 11 : i64} {
  func.func @_linear_kernel(%arg0: i32, %arg1: i32, %arg2: i32, %arg3: memref<16x128xf32, #tpu.memory_space<vmem>>, %arg4: memref<128x128xbf16, #tpu.memory_space<vmem>>, %arg5: memref<1x128xf32, #tpu.memory_space<vmem>>, %arg6: memref<16x128xf32, #tpu.memory_space<vmem>>, %arg7: memref<16x128xf32, #tpu.memory_space<vmem>>) attributes {dimension_semantics = [#tpu.dimension_semantics<parallel>, #tpu.dimension_semantics<parallel>, #tpu.dimension_semantics<arbitrary>], iteration_bounds = array<i64: 2, 1, 1>, scalar_prefetch = 0 : i64, scratch_operands = 1 : i64, tpu.core_type = #tpu.core_type<tc>, window_params = [{transform_indices = @transform_0, window_bounds = array<i64: 16, 128>}, {transform_indices = @transform_1, window_bounds = array<i64: 128, 128>}, {transform_indices = @transform_2, window_bounds = array<i64: 1, 128>}, {transform_indices = @transform_3, window_bounds = array<i64: 16, 128>}]} {
    %c0_i32 = arith.constant 0 : i32
    %0 = arith.cmpi eq, %arg2, %c0_i32 : i32
    %1 = arith.extui %0 : i1 to i32
    %c0_i32_0 = arith.constant 0 : i32
    %2 = arith.cmpi ne, %1, %c0_i32_0 : i32
    scf.if %2 {
      %cst_10 = arith.constant 0.000000e+00 : f32
      %13 = vector.broadcast %cst_10 : f32 to vector<16x128xf32>
      %c0_11 = arith.constant 0 : index
      %c0_12 = arith.constant 0 : index
      %14 = vector.load %arg7[%c0_11, %c0_12] : memref<16x128xf32, #tpu.memory_space<vmem>>, vector<16x128xf32>
      tpu.vector_store %arg7[%c0_11, %c0_12], %13 {strides = array<i32>} : memref<16x128xf32, #tpu.memory_space<vmem>>, vector<16x128xf32>,
    } else {
    }
    %c0 = arith.constant 0 : index
    %c0_1 = arith.constant 0 : index
    %3 = vector.load %arg7[%c0, %c0_1] : memref<16x128xf32, #tpu.memory_space<vmem>>, vector<16x128xf32>
    %c0_2 = arith.constant 0 : index
    %c0_3 = arith.constant 0 : index
    %4 = vector.load %arg3[%c0_2, %c0_3] : memref<16x128xf32, #tpu.memory_space<vmem>>, vector<16x128xf32>
    %5 = arith.truncf %4 : vector<16x128xf32> to vector<16x128xbf16>
    %c0_4 = arith.constant 0 : index
    %c0_5 = arith.constant 0 : index
    %6 = vector.load %arg4[%c0_4, %c0_5] : memref<128x128xbf16, #tpu.memory_space<vmem>>, vector<128x128xbf16>
    %cst = arith.constant dense<0.000000e+00> : vector<16x128xf32>
    %7 = tpu.matmul %5, %6, %cst {dimension_numbers = #tpu.dot_dimension_numbers<[1], [0], [0], [1], [0, 0, 1, 1], [], []>} : vector<16x128xbf16>, vector<128x128xbf16>, vector<16x128xf32> -> vector<16x128xf32>
    %8 = arith.addf %3, %7 : vector<16x128xf32>
    %c0_6 = arith.constant 0 : index
    %c0_7 = arith.constant 0 : index
    %9 = vector.load %arg7[%c0_6, %c0_7] : memref<16x128xf32, #tpu.memory_space<vmem>>, vector<16x128xf32>
    tpu.vector_store %arg7[%c0_6, %c0_7], %8 {strides = array<i32>} : memref<16x128xf32, #tpu.memory_space<vmem>>, vector<16x128xf32>,
    %c0_i32_8 = arith.constant 0 : i32
    %10 = arith.cmpi eq, %arg2, %c0_i32_8 : i32
    %11 = arith.extui %10 : i1 to i32
    %c0_i32_9 = arith.constant 0 : i32
    %12 = arith.cmpi ne, %11, %c0_i32_9 : i32
    scf.if %12 {
      %c0_10 = arith.constant 0 : index
      %c0_11 = arith.constant 0 : index
      %13 = vector.load %arg7[%c0_10, %c0_11] : memref<16x128xf32, #tpu.memory_space<vmem>>, vector<16x128xf32>
      %c0_12 = arith.constant 0 : index
      %c0_13 = arith.constant 0 : index
      %14 = vector.load %arg5[%c0_12, %c0_13] : memref<1x128xf32, #tpu.memory_space<vmem>>, vector<1x128xf32>
      %15 = vector.broadcast %14 : vector<1x128xf32> to vector<16x128xf32>
      %16 = arith.addf %13, %15 : vector<16x128xf32>
      %c0_14 = arith.constant 0 : index
      %c0_15 = arith.constant 0 : index
      %17 = vector.load %arg6[%c0_14, %c0_15] : memref<16x128xf32, #tpu.memory_space<vmem>>, vector<16x128xf32>
      tpu.vector_store %arg6[%c0_14, %c0_15], %16 {strides = array<i32>} : memref<16x128xf32, #tpu.memory_space<vmem>>, vector<16x128xf32>,
    } else {
    }
    return
  }
  func.func @transform_0(%arg0: i32, %arg1: i32, %arg2: i32) -> (i32, i32) {
    %c0_i32 = arith.constant 0 : i32
    return %arg0, %arg2 : i32, i32
  }
  func.func @transform_1(%arg0: i32, %arg1: i32, %arg2: i32) -> (i32, i32) {
    %c0_i32 = arith.constant 0 : i32
    return %arg2, %arg1 : i32, i32
  }
  func.func @transform_2(%arg0: i32, %arg1: i32, %arg2: i32) -> (i32, i32) {
    %c0_i32 = arith.constant 0 : i32
    %c0_i32_0 = arith.constant 0 : i32
    return %c0_i32, %arg1 : i32, i32
  }
  func.func @transform_3(%arg0: i32, %arg1: i32, %arg2: i32) -> (i32, i32) {
    %c0_i32 = arith.constant 0 : i32
    return %arg0, %arg1 : i32, i32
  }
}

</mosaic_0001>

<llo_original>
// kernel: tpu_custom_call.1
$region0: #{tpu_custom_call.1}
  #allocation0 [shape = 'u32[]', space=smem, size = 0x4, offset = 0x4, fixed_abs, tag = 'smem constant byte address 0x4 - core index']
  #allocation1 [shape = 'u32[72,128]{1,0:T(1,128)}', space=vmem, size = 0x9000, scoped, tag = 'internal scratch']
  #allocation2 [shape = 'f32[16,128]{1,0:T(8,128)}', space=vmem, size = 0x2000, scoped, tag = 'scratch operand']
  %s0 = inlined_call_operand.hbm [shape: f32[32,128], index: 0, kind: input, shape index: {}]
  %s1 = inlined_call_operand.hbm [shape: bf16[128,128], index: 1, kind: input, shape index: {}]
  %s2 = inlined_call_operand.vmem [shape: f32[1,128], index: 2, kind: input, shape index: {}]
  %s3 = inlined_call_operand.hbm [shape: f32[32,128], index: 3, kind: output, shape index: {}]
  %s4 = sld [smem:[#allocation0]]
  $region61: #{tpu_custom_call.1} parent=0
    _
  %s6 = ssub.s32 1, %s4
  %s7 = scalar_select 0, %s6, %s4
  $region1: #{tpu_custom_call.1} parent=0
    #allocation3 [shape = 'u8[16384]{0}', space=vmem, size = 0x4000, scoped, tag = 'input window, operand 0']
    #allocation4 [shape = 's32[2]{0}', space=sflag, size = 0x8, scoped, tag = 'scoped memory for tpu_custom_call.1']
    #allocation5 [shape = 's32[2]{0}', space=sflag, size = 0x8, scoped, tag = 'scoped memory for tpu_custom_call.1']
    #allocation6 [shape = 'u8[32768]{0}', space=vmem, size = 0x8000, scoped, tag = 'input window, operand 1, single buffered']
    #allocation7 [shape = 's32[1]{0}', space=sflag, size = 0x4, scoped, tag = 'scoped memory for tpu_custom_call.1']
    #allocation8 [shape = 'u8[16384]{0}', space=vmem, size = 0x4000, scoped, tag = 'output window, operand 0']
    %8 = vsyncpa [#allocation4], 0
    %s9 = scalar_lea.sflag [#allocation4], 1
    %10 = vsyncpa %s9, 0
    %11 = vsyncpa [#allocation7], 0
    %12 = vsyncpa [#allocation5], 0
    %s13 = scalar_lea.sflag [#allocation5], 1
    %14 = vsyncpa %s13, 0
    loop: start=0, step=1, limit=4
    $region2: #{tpu_custom_call.1} parent=1 // loop_pre_header
      _
    $region3: #{tpu_custom_call.1} parent=1 // loop_header
      %s16 = sphi 0, %s20
      %p17 = scmp.ge.s32.totalorder %s16, 4
      %s23 = sphi 0, %s42
      %s24 = sphi 0, %s38
      %s25 = sphi 0, %s34
      %s26 = sphi 0, %s23
      %s27 = sphi 0, %s24
      %s28 = sphi 0, %s25
      %s29 = sphi 0, %s26
      %s30 = sphi 0, %s27
      %s31 = sphi 0, %s28
      %s47 = sphi 0, %s49
      %s50 = sphi 0, %s47
      %s51 = sphi 0, %s50
      %s67 = sphi 0, %s51
      %s75 = sphi 0, %s77
      %s78 = sphi 0, %s75
      %s79 = sphi 0, %s78
      %s95 = sphi 0, %s79
      %s101 = sphi 0, %s103
      %s104 = sphi 0, %s101
      %s105 = sphi 0, %s104
      %s121 = sphi 0, %s105
      %s129 = sphi 0, %s131
      %s132 = sphi 0, %s129
      %s133 = sphi 0, %s132
      %s149 = sphi 0, %s133
    $region4: #{tpu_custom_call.1} parent=1 // loop_header_branch
      %19 = sbr.rel (%p17) target = $region8
    $region5: #{tpu_custom_call.1} parent=1 // loop_body
      %s21 = ssub.s32 %s16, 1
      %s22 = ssub.s32 %s16, 2
      %s32 = sadd.s32 1, %s25
      %p33 = scmp.ge.s32.totalorder %s32, 1
      %s34 = scalar_select %p33, 0, %s32
      %s35 = sadd.s32 1, %s24
      %s36 = scalar_select %p33, %s35, %s24
      %p37 = scmp.ge.s32.totalorder %s36, 1
      %s38 = scalar_select %p37, 0, %s36
      %s39 = sadd.s32 1, %s23
      %s40 = scalar_select %p37, %s39, %s23
      %p41 = scmp.ge.s32.totalorder %s40, 2
      %s42 = scalar_select %p41, 0, %s40
      %s43 = ssub.s32 %s23, %s42
      %s44 = ssub.s32 %s25, %s34
      %s45 = sor.u32 %s43, %s44
      %p46 = scmp.eq.s32.totalorder %s45, 0
      %s48 = sadd.s32 %s47, 1
      %s49 = scalar_select %p46, %s47, %s48
      %p52 = pneg %p46
      %p53 = scmp.eq.s32.totalorder %s16, 1
      %p54 = por %p52, %p53
      %p55 = scmp.ne.s32.totalorder %s47, %s50
      %p56 = scmp.eq.s32.totalorder %s16, 0
      %p57 = por %p55, %p56
      %p58 = scmp.ne.s32.totalorder %s47, %s50
      %p59 = scmp.eq.s32.totalorder %s21, 1
      %p60 = por %p58, %p59
      %p61 = scmp.ne.s32.totalorder %s50, %s51
      %p62 = scmp.eq.s32.totalorder %s21, 0
      %p63 = por %p61, %p62
      %p64 = scmp.ne.s32.totalorder %s50, %s51
      %p65 = scmp.eq.s32.totalorder %s22, 1
      %p66 = por %p64, %p65
      %p68 = scmp.ne.s32.totalorder %s51, %s67
      %p69 = scmp.eq.s32.totalorder %s22, 0
      %p70 = por %p68, %p69
      %s71 = ssub.s32 %s25, %s34
      %s72 = ssub.s32 %s24, %s38
      %s73 = sor.u32 %s71, %s72
      %p74 = scmp.eq.s32.totalorder %s73, 0
      %s76 = sadd.s32 %s75, 1
      %s77 = scalar_select %p74, %s75, %s76
      %p80 = pneg %p74
      %p81 = scmp.eq.s32.totalorder %s16, 1
      %p82 = por %p80, %p81
      %p83 = scmp.ne.s32.totalorder %s75, %s78
      %p84 = scmp.eq.s32.totalorder %s16, 0
      %p85 = por %p83, %p84
      %p86 = scmp.ne.s32.totalorder %s75, %s78
      %p87 = scmp.eq.s32.totalorder %s21, 1
      %p88 = por %p86, %p87
      %p89 = scmp.ne.s32.totalorder %s78, %s79
      %p90 = scmp.eq.s32.totalorder %s21, 0
      %p91 = por %p89, %p90
      %p92 = scmp.ne.s32.totalorder %s78, %s79
      %p93 = scmp.eq.s32.totalorder %s22, 1
      %p94 = por %p92, %p93
      %p96 = scmp.ne.s32.totalorder %s79, %s95
      %p97 = scmp.eq.s32.totalorder %s22, 0
      %p98 = por %p96, %p97
      %s99 = ssub.s32 %s24, %s38
      %p100 = scmp.eq.s32.totalorder %s99, 0
      %s102 = sadd.s32 %s101, 1
      %s103 = scalar_select %p100, %s101, %s102
      %p106 = pneg %p100
      %p107 = scmp.eq.s32.totalorder %s16, 1
      %p108 = por %p106, %p107
      %p109 = scmp.ne.s32.totalorder %s101, %s104
      %p110 = scmp.eq.s32.totalorder %s16, 0
      %p111 = por %p109, %p110
      %p112 = scmp.ne.s32.totalorder %s101, %s104
      %p113 = scmp.eq.s32.totalorder %s21, 1
      %p114 = por %p112, %p113
      %p115 = scmp.ne.s32.totalorder %s104, %s105
      %p116 = scmp.eq.s32.totalorder %s21, 0
      %p117 = por %p115, %p116
      %p118 = scmp.ne.s32.totalorder %s104, %s105
      %p119 = scmp.eq.s32.totalorder %s22, 1
      %p120 = por %p118, %p119
      %p122 = scmp.ne.s32.totalorder %s105, %s121
      %p123 = scmp.eq.s32.totalorder %s22, 0
      %p124 = por %p122, %p123
      %s125 = ssub.s32 %s23, %s42
      %s126 = ssub.s32 %s24, %s38
      %s127 = sor.u32 %s125, %s126
      %p128 = scmp.eq.s32.totalorder %s127, 0
      %s130 = sadd.s32 %s129, 1
      %s131 = scalar_select %p128, %s129, %s130
      %p134 = pneg %p128
      %p135 = scmp.eq.s32.totalorder %s16, 1
      %p136 = por %p134, %p135
      %p137 = scmp.ne.s32.totalorder %s129, %s132
      %p138 = scmp.eq.s32.totalorder %s16, 0
      %p139 = por %p137, %p138
      %p140 = scmp.ne.s32.totalorder %s129, %s132
      %p141 = scmp.eq.s32.totalorder %s21, 1
      %p142 = por %p140, %p141
      %p143 = scmp.ne.s32.totalorder %s132, %s133
      %p144 = scmp.eq.s32.totalorder %s21, 0
      %p145 = por %p143, %p144
      %p146 = scmp.ne.s32.totalorder %s132, %s133
      %p147 = scmp.eq.s32.totalorder %s22, 1
      %p148 = por %p146, %p147
      %p150 = scmp.ne.s32.totalorder %s133, %s149
      %p151 = scmp.eq.s32.totalorder %s22, 0
      %p152 = por %p150, %p151
      %p153 = scmp.le.s32.totalorder 1, %s16
      %p154 = scmp.lt.s32.totalorder %s16, 3
      %p155 = pnand %p153, %p154
      %p156 = pneg %p155
      // Predicated region
      $region9: #{tpu_custom_call.1} parent=5 // pred_check
        _
      $region10: #{tpu_custom_call.1} parent=5 // pred_check_branch
        %158 = sbr.rel (%p155) target = $region12
      $region11: #{tpu_custom_call.1} parent=5 // pred_region
        %s159 = ssub.s32 %s16, 1
        // Predicated region
        $region13: #{tpu_custom_call.1} parent=11 // pred_check
          %p160 = pneg %p91
        $region14: #{tpu_custom_call.1} parent=11 // pred_check_branch
          %162 = sbr.rel (%p160) target = $region16
        $region15: #{tpu_custom_call.1} parent=11 // pred_region
          %s163 = smul.u32 16, %s28
          %165 = vsyncadd [#allocation7], 0
          %s166 = sadd.s32 %s27, %s163
          %s167 = smul.addr %s166, 4
          %s168 = scalar_lea.hbm %s1, %s167
          %s169 = sshll.u32 %s168, 4
          %s170 = int_to_ptr.hbm [resolvable:$true] %s169
          %s171 = sshll.u32 [#allocation6], 4
          %s172 = int_to_ptr.vmem [resolvable:$true] %s171
          %177 = dma.hbm_to_vmem [thread:$0]  %s170, 1024, %s172, [#allocation7], 64, 64, 4
        $region16: #{tpu_custom_call.1} parent=11 // pred_fallthru
          _
        // Predicated region
        $region17: #{tpu_custom_call.1} parent=11 // pred_check
          %p178 = pneg %p117
        $region18: #{tpu_custom_call.1} parent=11 // pred_check_branch
          %180 = sbr.rel (%p178) target = $region20
        $region19: #{tpu_custom_call.1} parent=11 // pred_region
          %p181 = scmp.lt.s32.totalorder %s27, 0
          %s182 = scalar_select %p181, %s27, 0
          %s183 = scalar_lea.vmem %s2, %s182
        $region20: #{tpu_custom_call.1} parent=11 // pred_fallthru
          _
      $region12: #{tpu_custom_call.1} parent=5 // pred_fallthru
        _
      %p184 = scmp.lt.s32.totalorder %s16, 2
      // Predicated region
      $region21: #{tpu_custom_call.1} parent=5 // pred_check
        %p185 = pneg %p184
      $region22: #{tpu_custom_call.1} parent=5 // pred_check_branch
        %187 = sbr.rel (%p185) target = $region24
      $region23: #{tpu_custom_call.1} parent=5 // pred_region
        // Predicated region
        $region25: #{tpu_custom_call.1} parent=23 // pred_check
          %p188 = pneg %p57
        $region26: #{tpu_custom_call.1} parent=23 // pred_check_branch
          %190 = sbr.rel (%p188) target = $region28
        $region27: #{tpu_custom_call.1} parent=23 // pred_region
          %s191 = sand.u32 %s47, 1
          %s192 = scalar_lea.sflag [#allocation4], %s191
          %s193 = sand.u32 %s47, 1
          %s194 = smul.addr %s193, 16
          %s195 = scalar_lea.vmem [#allocation3], %s194
          %s196 = smul.u32 2, %s23
          %198 = vsyncadd %s192, 0
          %s199 = sadd.s32 %s25, %s196
          %s200 = smul.addr %s199, 8
          %s201 = scalar_lea.hbm %s0, %s200
          %s202 = sshll.u32 %s201, 4
          %s203 = int_to_ptr.hbm [resolvable:$true] %s202
          %s204 = sshll.u32 %s195, 4
          %s205 = int_to_ptr.vmem [resolvable:$true] %s204
          %210 = dma.hbm_to_vmem [thread:$0]  %s203, 256, %s205, %s192, 128, 128, 8
        $region28: #{tpu_custom_call.1} parent=23 // pred_fallthru
          _
      $region24: #{tpu_custom_call.1} parent=5 // pred_fallthru
        _
      %p211 = scmp.le.s32.totalorder 1, %s16
      %p212 = scmp.lt.s32.totalorder %s16, 3
      %p213 = pnand %p211, %p212
      %p214 = pneg %p213
      // Predicated region
      $region29: #{tpu_custom_call.1} parent=5 // pred_check
        _
      $region30: #{tpu_custom_call.1} parent=5 // pred_check_branch
        %216 = sbr.rel (%p213) target = $region32
      $region31: #{tpu_custom_call.1} parent=5 // pred_region
        %s217 = ssub.s32 %s16, 1
        %s218 = sand.u32 %s50, 1
        %s219 = scalar_lea.sflag [#allocation4], %s218
        %s220 = sand.u32 %s50, 1
        %s221 = smul.addr %s220, 16
        %s222 = scalar_lea.vmem [#allocation3], %s221
        // Predicated region
        $region33: #{tpu_custom_call.1} parent=31 // pred_check
          %p223 = pneg %p63
        $region34: #{tpu_custom_call.1} parent=31 // pred_check_branch
          %225 = sbr.rel (%p223) target = $region36
        $region35: #{tpu_custom_call.1} parent=31 // pred_region
          %227 = dma.done %s219, 256
        $region36: #{tpu_custom_call.1} parent=31 // pred_fallthru
          _
        // Predicated region
        $region37: #{tpu_custom_call.1} parent=31 // pred_check
          %p228 = pneg %p91
        $region38: #{tpu_custom_call.1} parent=31 // pred_check_branch
          %230 = sbr.rel (%p228) target = $region40
        $region39: #{tpu_custom_call.1} parent=31 // pred_region
          %232 = dma.done [#allocation7], 1024
        $region40: #{tpu_custom_call.1} parent=31 // pred_fallthru
          _
        %s233 = sand.u32 %s50, 1
        %s234 = scalar_lea.sflag [#allocation4], %s233
        %s235 = sand.u32 %s50, 1
        %s236 = smul.addr %s235, 16
        %s237 = scalar_lea.vmem [#allocation3], %s236
        %p238 = pneg %p63
        %p239 = pneg %p60
        %p240 = pneg %p91
        %p241 = pneg %p88
        %p242 = scmp.lt.s32.totalorder %s27, 0
        %s243 = scalar_select %p242, %s27, 0
        %s244 = scalar_lea.vmem %s2, %s243
        %p245 = pneg %p117
        %p246 = pneg %p114
        %p247 = pneg %p145
        %p248 = pneg %p142
        %s249 = sand.u32 %s132, 1
        %s250 = scalar_lea.sflag [#allocation5], %s249
        %s251 = sand.u32 %s132, 1
        %s252 = smul.addr %s251, 16
        %s253 = scalar_lea.vmem [#allocation8], %s252
        %s254 = smul.u32 2, %s26
        %s255 = smul.u32 16, %s28
        %p256 = scmp.lt.s32.totalorder %s27, 0
        %s257 = scalar_select %p256, %s27, 0
        %s258 = scalar_lea.vmem %s2, %s257
        %s259 = smul.u32 2, %s26
        %p260 = scmp.eq.s32.totalorder %s28, 0
        // Predicated region
        $region41: #{tpu_custom_call.1} parent=31 // pred_check
          %p261 = pneg %p260
        $region42: #{tpu_custom_call.1} parent=31 // pred_check_branch
          %263 = sbr.rel (%p261) target = $region44
        $region43: #{tpu_custom_call.1} parent=31 // pred_region
          %264 = vst [vmem:[#allocation2] sm:$0xff] 0.0
          %265 = vst [vmem:[#allocation2 + $0x8] sm:$0xff] 0.0
        $region44: #{tpu_custom_call.1} parent=31 // pred_fallthru
          _
        %v266 = vld [vmem:[#allocation2] sm:$0xff]
        %v267 = vld [vmem:[#allocation2 + $0x8] sm:$0xff]
        %v268 = vld [vmem:[%s222] sm:$0xff]
        %v269 = vld [vmem:[%s222 + $0x8] sm:$0xff]
        %v270 = vpack.c.bf16 %v269, %v268
        %v271 = vld [vmem:[#allocation6] sm:$0xf]
        %v272 = vld [vmem:[#allocation6 + $0x4] sm:$0xf]
        %v273 = vld [vmem:[#allocation6 + $0x8] sm:$0xf]
        %v274 = vld [vmem:[#allocation6 + $0xc] sm:$0xf]
        %v275 = vld [vmem:[#allocation6 + $0x10] sm:$0xf]
        %v276 = vld [vmem:[#allocation6 + $0x14] sm:$0xf]
        %v277 = vld [vmem:[#allocation6 + $0x18] sm:$0xf]
        %v278 = vld [vmem:[#allocation6 + $0x1c] sm:$0xf]
        %v279 = vld [vmem:[#allocation6 + $0x20] sm:$0xf]
        %v280 = vld [vmem:[#allocation6 + $0x24] sm:$0xf]
        %v281 = vld [vmem:[#allocation6 + $0x28] sm:$0xf]
        %v282 = vld [vmem:[#allocation6 + $0x2c] sm:$0xf]
        %v283 = vld [vmem:[#allocation6 + $0x30] sm:$0xf]
        %v284 = vld [vmem:[#allocation6 + $0x34] sm:$0xf]
        %v285 = vld [vmem:[#allocation6 + $0x38] sm:$0xf]
        %v286 = vld [vmem:[#allocation6 + $0x3c] sm:$0xf]
        %v303 = vunpack.c.l.b16 %v271
        %v304 = vunpack.c.l.b16 %v272
        %v305 = vunpack.c.l.b16 %v273
        %v306 = vunpack.c.l.b16 %v274
        %v307 = vunpack.c.l.b16 %v275
        %v308 = vunpack.c.l.b16 %v276
        %v309 = vunpack.c.l.b16 %v277
        %v310 = vunpack.c.l.b16 %v278
        %v311 = vunpack.c.l.b16 %v279
        %v312 = vunpack.c.l.b16 %v280
        %v313 = vunpack.c.l.b16 %v281
        %v314 = vunpack.c.l.b16 %v282
        %v315 = vunpack.c.l.b16 %v283
        %v316 = vunpack.c.l.b16 %v284
        %v317 = vunpack.c.l.b16 %v285
        %v318 = vunpack.c.l.b16 %v286
        %v319 = vpack.c.b16 %v304, %v303
        %v320 = vpack.c.b16 %v306, %v305
        %v321 = vpack.c.b16 %v308, %v307
        %v322 = vpack.c.b16 %v310, %v309
        %v323 = vpack.c.b16 %v312, %v311
        %v324 = vpack.c.b16 %v314, %v313
        %v325 = vpack.c.b16 %v316, %v315
        %v326 = vpack.c.b16 %v318, %v317
        %335 = vmatpush.bf16.msra.mxu0 %v326
        %336 = vmatpush.bf16.msra.mxu0 %v325
        %337 = vmatpush.bf16.msra.mxu0 %v324
        %338 = vmatpush.bf16.msra.mxu0 %v323
        %339 = vmatpush.bf16.msra.mxu0 %v322
        %340 = vmatpush.bf16.msra.mxu0 %v321
        %341 = vmatpush.bf16.msra.mxu0 %v320
        %342 = vmatpush.bf16.msra.mxu0 %v319
        %343 = vmatmul.bf16.gmra.mxu0 %v270
        %v344 = vpop.f32.mrf.mxu0
        %v345 = vadd.f32 0.0, %v344
        %v346 = vpop.f32.mrf.mxu0
        %v347 = vadd.f32 0.0, %v346
        %348 = vdwg.mxu0
        %v349 = vadd.f32 %v266, %v345
        %v350 = vadd.f32 %v267, %v347
        %351 = vst [vmem:[#allocation2] sm:$0xff] %v349
        %352 = vst [vmem:[#allocation2 + $0x8] sm:$0xff] %v350
        // Predicated region
        $region45: #{tpu_custom_call.1} parent=31 // pred_check
          %p353 = pneg %p260
        $region46: #{tpu_custom_call.1} parent=31 // pred_check_branch
          %355 = sbr.rel (%p353) target = $region48
        $region47: #{tpu_custom_call.1} parent=31 // pred_region
          %v356 = vld [vmem:[#allocation2] sm:$0xff]
          %v357 = vld [vmem:[#allocation2 + $0x8] sm:$0xff]
          %v358 = vld [vmem:[%s258] sm:$0x1]
          %v360 = vperm.slane %v358, 0
          %v362 = vadd.f32 %v356, %v360
          %v363 = vadd.f32 %v357, %v360
          %364 = vst [vmem:[%s253] sm:$0xff] %v362
          %365 = vst [vmem:[%s253 + $0x8] sm:$0xff] %v363
        $region48: #{tpu_custom_call.1} parent=31 // pred_fallthru
          _
        %s366 = sand.u32 %s132, 1
        %s367 = scalar_lea.sflag [#allocation5], %s366
        %s368 = sand.u32 %s132, 1
        %s369 = smul.addr %s368, 16
        %s370 = scalar_lea.vmem [#allocation8], %s369
        // Predicated region
        $region49: #{tpu_custom_call.1} parent=31 // pred_check
          %p371 = pneg %p142
        $region50: #{tpu_custom_call.1} parent=31 // pred_check_branch
          %373 = sbr.rel (%p371) target = $region52
        $region51: #{tpu_custom_call.1} parent=31 // pred_region
          %s374 = smul.u32 2, %s26
          %376 = vsyncadd %s367, 0
          %s377 = sadd.s32 %s27, %s374
          %s378 = smul.addr %s377, 8
          %s379 = scalar_lea.hbm %s3, %s378
          %s380 = sshll.u32 %s370, 4
          %s381 = int_to_ptr.vmem [resolvable:$true] %s380
          %s382 = sshll.u32 %s379, 4
          %s383 = int_to_ptr.hbm [resolvable:$true] %s382
          %388 = dma.vmem_to_hbm [thread:$0]  %s381, 256, %s383, %s367, 128, 128, 8
        $region52: #{tpu_custom_call.1} parent=31 // pred_fallthru
          _
      $region32: #{tpu_custom_call.1} parent=5 // pred_fallthru
        _
      %p389 = scmp.le.s32.totalorder 2, %s16
      // Predicated region
      $region53: #{tpu_custom_call.1} parent=5 // pred_check
        %p390 = pneg %p389
      $region54: #{tpu_custom_call.1} parent=5 // pred_check_branch
        %392 = sbr.rel (%p390) target = $region56
      $region55: #{tpu_custom_call.1} parent=5 // pred_region
        %s393 = ssub.s32 %s16, 2
        // Predicated region
        $region57: #{tpu_custom_call.1} parent=55 // pred_check
          %p394 = pneg %p148
        $region58: #{tpu_custom_call.1} parent=55 // pred_check_branch
          %396 = sbr.rel (%p394) target = $region60
        $region59: #{tpu_custom_call.1} parent=55 // pred_region
          %s397 = sand.u32 %s133, 1
          %s398 = scalar_lea.sflag [#allocation5], %s397
          %s399 = sand.u32 %s133, 1
          %s400 = smul.addr %s399, 16
          %s401 = scalar_lea.vmem [#allocation8], %s400
          %403 = dma.done %s398, 256
        $region60: #{tpu_custom_call.1} parent=55 // pred_fallthru
          _
      $region56: #{tpu_custom_call.1} parent=5 // pred_fallthru
        _
    $region6: #{tpu_custom_call.1} parent=1 // loop_footer
      %s20 = sadd.s32 1, %s16
    $region7: #{tpu_custom_call.1} parent=1 // loop_footer_branch
      %15 = sbr.rel target = $region3
    $region8: #{tpu_custom_call.1} parent=1 // loop_exit
      _
    %404 = vsyncpa [#allocation4], 1
    %s405 = scalar_lea.sflag [#allocation4], 1
    %406 = vsyncpa %s405, 1
    %407 = vsyncpa [#allocation7], 1
    %408 = vsyncpa [#allocation5], 1
    %s409 = scalar_lea.sflag [#allocation5], 1
    %410 = vsyncpa %s409, 1

</llo_original>
